<compile_context>
chip_gen: v5e
topology: v5e:2x2
jax: 0.10.0
libtpu: 0.0.40
codegen_flags: <defaults>
</compile_context>

<pallas_src>
import math
import functools

import numpy as np

import jax
import jax.numpy as jnp
from jax.experimental import pallas as pl
from jax.experimental.pallas import tpu as pltpu


def _pos_embed_kernel(tab_y_ref, tab_x_ref, o_ref, *, npf):
    """Write one (out_c, th, W) output block (batch dim squeezed).

    tab_y_ref: (npf, th, 1) — per-channel values for the th rows of this block
    tab_x_ref: (npf, 1, W)  — per-channel values for all W columns
    y-half needs only a lane broadcast, x-half only a sublane broadcast:
    no arithmetic, no transcendentals — pure store.
    """
    out_c, th, w = o_ref.shape
    o_ref[0:npf] = jnp.broadcast_to(tab_y_ref[...], (npf, th, w))
    o_ref[npf:out_c] = jnp.broadcast_to(tab_x_ref[...], (npf, th, w))


def _pick_h_tile(H, W, out_c, npf, B, budget_bytes=4 << 20):
    """Rows of the output written per grid step.

    Must be a multiple of 8 (or the full H).  Sized so the per-step VMEM
    (output block + lane-padded table blocks) stays around budget_bytes, and
    shrunk if needed so the grid has at least 2 steps (v7x: 2 TensorCores).
    """
    if H < 8:
        return H                                   # full-extent block (legal)
    w_pad = -(-W // 128) * 128                     # lane padding of a (th, W) tile
    per_row = out_c * w_pad * 4 + npf * 128 * 4    # output rows + tab_y rows
    fixed = npf * 8 * w_pad * 4                    # tab_x block (th-independent)
    max_rows = max(8, ((budget_bytes - fixed) // max(per_row, 1)) // 8 * 8)
    th = min((H // 8) * 8, max_rows)
    if B * pl.cdiv(H, th) < 2 and th > 8:          # guarantee >= 2 grid steps
        th = max(8, (th // 2) // 8 * 8)
    return th


def position_embedding_sine(x, num_pos_feats=64, temperature=10000,
                            normalize=False, scale=None):
    """Pallas equivalent of PositionEmbeddingSine.forward(x, class_token=False).

    x: (B, C, H, W). Only the *shape* of x is used (exactly like the PyTorch
    module). `num_pos_feats` is accepted but ignored, matching the PyTorch
    forward which re-derives it as C//2.  Returns (B, 2*(C//2), H, W) float32.
    """
    del num_pos_feats  # the PyTorch forward shadows it with C // 2
    if scale is not None and normalize is False:
        raise ValueError('normalize should be True if scale is passed')
    if scale is None:
        scale = 2 * math.pi

    B, C, H, W = x.shape
    npf = C // 2
    out_c = 2 * npf
    eps = 1e-5
    if npf == 0:
        return jnp.zeros((B, 0, H, W), jnp.float32)

    # ---- trace-time per-(channel,row) / per-(channel,col) sin/cos tables ----
    d = np.arange(npf, dtype=np.float64)
    inv_dim_t = float(temperature) ** (-(2.0 * np.floor(d / 2.0) / float(npf)))
    y_fac = (float(scale) / (H + eps)) if normalize else 1.0
    x_fac = (float(scale) / (W + eps)) if normalize else 1.0
    ang_y = np.arange(1, H + 1, dtype=np.float64)[None, :] * (inv_dim_t * y_fac)[:, None]
    ang_x = np.arange(1, W + 1, dtype=np.float64)[None, :] * (inv_dim_t * x_fac)[:, None]
    is_sin = (np.arange(npf) % 2 == 0)[:, None]          # even chan: sin, odd: cos
    tab_y = np.where(is_sin, np.sin(ang_y), np.cos(ang_y)).astype(np.float32)
    tab_x = np.where(is_sin, np.sin(ang_x), np.cos(ang_x)).astype(np.float32)
    tab_y = tab_y.reshape(npf, H, 1)   # row values  -> lane-broadcast in kernel
    tab_x = tab_x.reshape(npf, 1, W)   # col values  -> sublane-broadcast in kernel

    th = _pick_h_tile(H, W, out_c, npf, B)
    grid = (B, pl.cdiv(H, th))

    kernel = functools.partial(_pos_embed_kernel, npf=npf)
    out = pl.pallas_call(
        kernel,
        out_shape=jax.ShapeDtypeStruct((B, out_c, H, W), jnp.float32),
        grid=grid,
        in_specs=[
            pl.BlockSpec((npf, th, 1), lambda b, i: (0, i, 0)),
            pl.BlockSpec((npf, 1, W), lambda b, i: (0, 0, 0)),
        ],
        # Batch dim squeezed via None; kernel writes the same tile per batch
        # index directly, so no wrapper-level broadcast pass is needed.
        out_specs=pl.BlockSpec((None, out_c, th, W), lambda b, i: (b, 0, i, 0)),
        compiler_params=pltpu.CompilerParams(
            dimension_semantics=("parallel", "parallel")),
        cost_estimate=pl.CostEstimate(
            flops=B * out_c * H * W,            # broadcast/copy work, no math
            transcendentals=0,
            bytes_accessed=B * out_c * H * W * 4
                           + int(grid[0]) * int(grid[1]) * (npf * th + npf * W) * 4),
    )(jnp.asarray(tab_y), jnp.asarray(tab_x))
    return out


def _reference(x, temperature=10000, normalize=False, scale=2 * math.pi):
    """Pure-JAX transliteration of the PyTorch forward (for verification)."""
    B, C, H, W = x.shape
    npf = C // 2
    not_mask = jnp.ones((B, H, W), jnp.float32)
    y_embed = jnp.cumsum(not_mask, axis=1)
    x_embed = jnp.cumsum(not_mask, axis=2)
    if normalize:
        eps = 1e-5
        y_embed = y_embed / (y_embed[:, -1:, :] + eps) * scale
        x_embed = x_embed / (x_embed[:, :, -1:] + eps) * scale
    dim_t = jnp.arange(npf, dtype=jnp.float32)
    dim_t = temperature ** (2 * jnp.floor(dim_t / 2) / npf)
    pos_x = x_embed[:, :, :, None] / dim_t
    pos_y = y_embed[:, :, :, None] / dim_t
    pos_x = jnp.stack((jnp.sin(pos_x[..., 0::2]), jnp.cos(pos_x[..., 1::2])),
                      axis=4).reshape(B, H, W, npf)
    pos_y = jnp.stack((jnp.sin(pos_y[..., 0::2]), jnp.cos(pos_y[..., 1::2])),
                      axis=4).reshape(B, H, W, npf)
    pos = jnp.concatenate((pos_y, pos_x), axis=3).transpose(0, 3, 1, 2)
    return pos


if __name__ == "__main__":
    key = jax.random.PRNGKey(0)
    B, C, H, W = 2, 4, 16, 16
    x = jax.random.normal(key, (B, C, H, W), dtype=jnp.float32)

    # default (normalize=False)
    pos = jax.block_until_ready(position_embedding_sine(x))
    ref = _reference(x)
    assert pos.shape == ref.shape == (B, C, H, W)
    assert jnp.allclose(pos, ref, atol=1e-5, rtol=1e-5), "mismatch (normalize=False)"

    # normalized variant
    pos_n = jax.block_until_ready(position_embedding_sine(x, normalize=True))
    ref_n = _reference(x, normalize=True)
    assert jnp.allclose(pos_n, ref_n, atol=1e-5, rtol=1e-5), "mismatch (normalize=True)"

    print("KERNEL_OK")
</pallas_src>

<mosaic_0001>
module attributes {stable_mosaic.version = 11 : i64} {
  func.func @_pos_embed_kernel(%arg0: i32, %arg1: i32, %arg2: memref<2x16x1xf32, #tpu.memory_space<vmem>>, %arg3: memref<2x1x16xf32, #tpu.memory_space<vmem>>, %arg4: memref<1x4x16x16xf32, #tpu.memory_space<vmem>>) attributes {dimension_semantics = [#tpu.dimension_semantics<parallel>, #tpu.dimension_semantics<parallel>], iteration_bounds = array<i64: 2, 1>, scalar_prefetch = 0 : i64, scratch_operands = 0 : i64, tpu.core_type = #tpu.core_type<tc>, window_params = [{transform_indices = @transform_0, window_bounds = array<i64: 2, 16, 1>}, {pipeline_mode = #tpu.pipeline_mode<synchronous>, transform_indices = @transform_1, window_bounds = array<i64: 2, 1, 16>}, {transform_indices = @transform_2, window_bounds = array<i64: 1, 4, 16, 16>}]} {
    %c0 = arith.constant 0 : index
    %c0_0 = arith.constant 0 : index
    %c0_1 = arith.constant 0 : index
    %0 = vector.load %arg2[%c0, %c0_0, %c0_1] : memref<2x16x1xf32, #tpu.memory_space<vmem>>, vector<2x16x1xf32>
    %1 = vector.shape_cast %0 : vector<2x16x1xf32> to vector<2x16x1xf32>
    %2 = vector.broadcast %1 : vector<2x16x1xf32> to vector<2x16x16xf32>
    %c0_2 = arith.constant 0 : index
    %c0_3 = arith.constant 0 : index
    %c0_4 = arith.constant 0 : index
    %c0_5 = arith.constant 0 : index
    %3 = vector.load %arg4[%c0_2, %c0_3, %c0_4, %c0_5] : memref<1x4x16x16xf32, #tpu.memory_space<vmem>>, vector<1x2x16x16xf32>
    %4 = vector.shape_cast %3 : vector<1x2x16x16xf32> to vector<2x16x16xf32>
    %5 = vector.shape_cast %2 : vector<2x16x16xf32> to vector<1x2x16x16xf32>
    tpu.vector_store %arg4[%c0_2, %c0_3, %c0_4, %c0_5], %5 {strides = array<i32>} : memref<1x4x16x16xf32, #tpu.memory_space<vmem>>, vector<1x2x16x16xf32>,
    %c0_6 = arith.constant 0 : index
    %c0_7 = arith.constant 0 : index
    %c0_8 = arith.constant 0 : index
    %6 = vector.load %arg3[%c0_6, %c0_7, %c0_8] : memref<2x1x16xf32, #tpu.memory_space<vmem>>, vector<2x1x16xf32>
    %7 = vector.shape_cast %6 : vector<2x1x16xf32> to vector<2x1x16xf32>
    %8 = vector.broadcast %7 : vector<2x1x16xf32> to vector<2x16x16xf32>
    %c0_9 = arith.constant 0 : index
    %c2 = arith.constant 2 : index
    %c0_10 = arith.constant 0 : index
    %c0_11 = arith.constant 0 : index
    %9 = vector.load %arg4[%c0_9, %c2, %c0_10, %c0_11] : memref<1x4x16x16xf32, #tpu.memory_space<vmem>>, vector<1x2x16x16xf32>
    %10 = vector.shape_cast %9 : vector<1x2x16x16xf32> to vector<2x16x16xf32>
    %11 = vector.shape_cast %8 : vector<2x16x16xf32> to vector<1x2x16x16xf32>
    tpu.vector_store %arg4[%c0_9, %c2, %c0_10, %c0_11], %11 {strides = array<i32>} : memref<1x4x16x16xf32, #tpu.memory_space<vmem>>, vector<1x2x16x16xf32>,
    return
  }
  func.func @transform_0(%arg0: i32, %arg1: i32) -> (i32, i32, i32) {
    %c0_i32 = arith.constant 0 : i32
    %c0_i32_0 = arith.constant 0 : i32
    %c0_i32_1 = arith.constant 0 : i32
    return %c0_i32, %arg1, %c0_i32_0 : i32, i32, i32
  }
  func.func @transform_1(%arg0: i32, %arg1: i32) -> (i32, i32, i32) {
    %c0_i32 = arith.constant 0 : i32
    %c0_i32_0 = arith.constant 0 : i32
    %c0_i32_1 = arith.constant 0 : i32
    %c0_i32_2 = arith.constant 0 : i32
    return %c0_i32, %c0_i32_0, %c0_i32_1 : i32, i32, i32
  }
  func.func @transform_2(%arg0: i32, %arg1: i32) -> (i32, i32, i32, i32) {
    %c0_i32 = arith.constant 0 : i32
    %c0_i32_0 = arith.constant 0 : i32
    %c0_i32_1 = arith.constant 0 : i32
    return %arg0, %c0_i32, %arg1, %c0_i32_0 : i32, i32, i32, i32
  }
}

</mosaic_0001>

<llo_original>
// kernel: tpu_custom_call.1
$region0: #{tpu_custom_call.1}
  #allocation0 [shape = 'u32[]', space=smem, size = 0x4, offset = 0x4, fixed_abs, tag = 'smem constant byte address 0x4 - core index']
  #allocation1 [shape = 'u32[72,128]{1,0:T(1,128)}', space=vmem, size = 0x9000, scoped, tag = 'internal scratch']
  %s0 = inlined_call_operand.vmem [shape: f32[2,16,1], index: 0, kind: input, shape index: {}]
  %s1 = inlined_call_operand.vmem [shape: f32[2,1,16], index: 1, kind: input, shape index: {}]
  %s2 = inlined_call_operand.hbm [shape: f32[2,4,16,16], index: 2, kind: output, shape index: {}]
  %s3 = sld [smem:[#allocation0]]
  $region41: #{tpu_custom_call.1} parent=0
    _
  %s5 = ssub.s32 1, %s3
  %s6 = scalar_select 0, %s5, %s3
  $region1: #{tpu_custom_call.1} parent=0
    #allocation2 [shape = 'u8[65536]{0}', space=vmem, size = 0x10000, scoped, tag = 'output window, operand 0']
    #allocation3 [shape = 's32[2]{0}', space=sflag, size = 0x8, scoped, tag = 'scoped memory for tpu_custom_call.1']
    %7 = vsyncpa [#allocation3], 0
    %s8 = scalar_lea.sflag [#allocation3], 1
    %9 = vsyncpa %s8, 0
    loop: start=0, step=1, limit=4
    $region2: #{tpu_custom_call.1} parent=1 // loop_pre_header
      _
    $region3: #{tpu_custom_call.1} parent=1 // loop_header
      %s11 = sphi 0, %s15
      %p12 = scmp.ge.s32.totalorder %s11, 4
      %s18 = sphi 0, %s30
      %s19 = sphi 0, %s26
      %s20 = sphi 0, %s18
      %s21 = sphi 0, %s19
      %s22 = sphi 0, %s20
      %s23 = sphi 0, %s21
      %s33 = sphi 0, %s35
      %s36 = sphi 0, %s33
      %s37 = sphi 0, %s36
      %s53 = sphi 0, %s37
      %s57 = sphi 0, %s57
      %s59 = sphi 0, %s57
      %s60 = sphi 0, %s59
      %s74 = sphi 0, %s60
      %s82 = sphi 0, %s84
      %s85 = sphi 0, %s82
      %s86 = sphi 0, %s85
      %s102 = sphi 0, %s86
    $region4: #{tpu_custom_call.1} parent=1 // loop_header_branch
      %14 = sbr.rel (%p12) target = $region8
    $region5: #{tpu_custom_call.1} parent=1 // loop_body
      %s16 = ssub.s32 %s11, 1
      %s17 = ssub.s32 %s11, 2
      %s24 = sadd.s32 1, %s19
      %p25 = scmp.ge.s32.totalorder %s24, 1
      %s26 = scalar_select %p25, 0, %s24
      %s27 = sadd.s32 1, %s18
      %s28 = scalar_select %p25, %s27, %s18
      %p29 = scmp.ge.s32.totalorder %s28, 2
      %s30 = scalar_select %p29, 0, %s28
      %s31 = ssub.s32 %s19, %s26
      %p32 = scmp.eq.s32.totalorder %s31, 0
      %s34 = sadd.s32 %s33, 1
      %s35 = scalar_select %p32, %s33, %s34
      %p38 = pneg %p32
      %p39 = scmp.eq.s32.totalorder %s11, 1
      %p40 = por %p38, %p39
      %p41 = scmp.ne.s32.totalorder %s33, %s36
      %p42 = scmp.eq.s32.totalorder %s11, 0
      %p43 = por %p41, %p42
      %p44 = scmp.ne.s32.totalorder %s33, %s36
      %p45 = scmp.eq.s32.totalorder %s16, 1
      %p46 = por %p44, %p45
      %p47 = scmp.ne.s32.totalorder %s36, %s37
      %p48 = scmp.eq.s32.totalorder %s16, 0
      %p49 = por %p47, %p48
      %p50 = scmp.ne.s32.totalorder %s36, %s37
      %p51 = scmp.eq.s32.totalorder %s17, 1
      %p52 = por %p50, %p51
      %p54 = scmp.ne.s32.totalorder %s37, %s53
      %p55 = scmp.eq.s32.totalorder %s17, 0
      %p56 = por %p54, %p55
      %s58 = sadd.s32 %s57, 1
      %p61 = scmp.eq.s32.totalorder %s11, 1
      %p62 = scmp.ne.s32.totalorder %s57, %s59
      %p63 = scmp.eq.s32.totalorder %s11, 0
      %p64 = por %p62, %p63
      %p65 = scmp.ne.s32.totalorder %s57, %s59
      %p66 = scmp.eq.s32.totalorder %s16, 1
      %p67 = por %p65, %p66
      %p68 = scmp.ne.s32.totalorder %s59, %s60
      %p69 = scmp.eq.s32.totalorder %s16, 0
      %p70 = por %p68, %p69
      %p71 = scmp.ne.s32.totalorder %s59, %s60
      %p72 = scmp.eq.s32.totalorder %s17, 1
      %p73 = por %p71, %p72
      %p75 = scmp.ne.s32.totalorder %s60, %s74
      %p76 = scmp.eq.s32.totalorder %s17, 0
      %p77 = por %p75, %p76
      %s78 = ssub.s32 %s18, %s30
      %s79 = ssub.s32 %s19, %s26
      %s80 = sor.u32 %s78, %s79
      %p81 = scmp.eq.s32.totalorder %s80, 0
      %s83 = sadd.s32 %s82, 1
      %s84 = scalar_select %p81, %s82, %s83
      %p87 = pneg %p81
      %p88 = scmp.eq.s32.totalorder %s11, 1
      %p89 = por %p87, %p88
      %p90 = scmp.ne.s32.totalorder %s82, %s85
      %p91 = scmp.eq.s32.totalorder %s11, 0
      %p92 = por %p90, %p91
      %p93 = scmp.ne.s32.totalorder %s82, %s85
      %p94 = scmp.eq.s32.totalorder %s16, 1
      %p95 = por %p93, %p94
      %p96 = scmp.ne.s32.totalorder %s85, %s86
      %p97 = scmp.eq.s32.totalorder %s16, 0
      %p98 = por %p96, %p97
      %p99 = scmp.ne.s32.totalorder %s85, %s86
      %p100 = scmp.eq.s32.totalorder %s17, 1
      %p101 = por %p99, %p100
      %p103 = scmp.ne.s32.totalorder %s86, %s102
      %p104 = scmp.eq.s32.totalorder %s17, 0
      %p105 = por %p103, %p104
      %p106 = scmp.le.s32.totalorder 1, %s11
      %p107 = scmp.lt.s32.totalorder %s11, 3
      %p108 = pnand %p106, %p107
      %p109 = pneg %p108
      // Predicated region
      $region9: #{tpu_custom_call.1} parent=5 // pred_check
        _
      $region10: #{tpu_custom_call.1} parent=5 // pred_check_branch
        %111 = sbr.rel (%p108) target = $region12
      $region11: #{tpu_custom_call.1} parent=5 // pred_region
        %s112 = ssub.s32 %s11, 1
        // Predicated region
        $region13: #{tpu_custom_call.1} parent=11 // pred_check
          %p113 = pneg %p49
        $region14: #{tpu_custom_call.1} parent=11 // pred_check_branch
          %115 = sbr.rel (%p113) target = $region16
        $region15: #{tpu_custom_call.1} parent=11 // pred_region
          %s116 = smul.u32 2, %s21
          %p117 = scmp.lt.s32.totalorder %s116, 1
          %s118 = scalar_select %p117, %s116, 1
          %s119 = smul.addr %s118, 8
          %s120 = scalar_lea.vmem %s0, %s119
          %s121 = smul.u32 2, %s21
        $region16: #{tpu_custom_call.1} parent=11 // pred_fallthru
          _
        // Predicated region
        $region17: #{tpu_custom_call.1} parent=11 // pred_check
          %p122 = pneg %p70
        $region18: #{tpu_custom_call.1} parent=11 // pred_check_branch
          %124 = sbr.rel (%p122) target = $region20
        $region19: #{tpu_custom_call.1} parent=11 // pred_region
          _
        $region20: #{tpu_custom_call.1} parent=11 // pred_fallthru
          _
      $region12: #{tpu_custom_call.1} parent=5 // pred_fallthru
        _
      %p125 = scmp.lt.s32.totalorder %s11, 2
      // Predicated region
      $region21: #{tpu_custom_call.1} parent=5 // pred_check
        %p126 = pneg %p125
      $region22: #{tpu_custom_call.1} parent=5 // pred_check_branch
        %128 = sbr.rel (%p126) target = $region24
      $region23: #{tpu_custom_call.1} parent=5 // pred_region
        _
      $region24: #{tpu_custom_call.1} parent=5 // pred_fallthru
        _
      %p129 = scmp.le.s32.totalorder 1, %s11
      %p130 = scmp.lt.s32.totalorder %s11, 3
      %p131 = pnand %p129, %p130
      %p132 = pneg %p131
      // Predicated region
      $region25: #{tpu_custom_call.1} parent=5 // pred_check
        _
      $region26: #{tpu_custom_call.1} parent=5 // pred_check_branch
        %134 = sbr.rel (%p131) target = $region28
      $region27: #{tpu_custom_call.1} parent=5 // pred_region
        %s135 = ssub.s32 %s11, 1
        %s136 = smul.u32 2, %s21
        %p137 = scmp.lt.s32.totalorder %s136, 1
        %s138 = scalar_select %p137, %s136, 1
        %s139 = smul.addr %s138, 8
        %s140 = scalar_lea.vmem %s0, %s139
        %p141 = pneg %p49
        %p142 = pneg %p46
        %p143 = pneg %p70
        %p144 = pneg %p67
        %p145 = pneg %p98
        %p146 = pneg %p95
        %s147 = sand.u32 %s85, 1
        %s148 = scalar_lea.sflag [#allocation3], %s147
        %s149 = sand.u32 %s85, 1
        %s150 = smul.addr %s149, 64
        %s151 = scalar_lea.vmem [#allocation2], %s150
        %s152 = smul.u32 2, %s21
        %p153 = scmp.lt.s32.totalorder %s152, 1
        %s154 = scalar_select %p153, %s152, 1
        %s155 = smul.addr %s154, 8
        %s156 = scalar_lea.vmem %s0, %s155
        %s157 = smul.u32 2, %s21
        %s158 = smul.u32 2, %s21
        %v159 = vld [vmem:[%s156] sm:$0xff]
        %v160 = vld [vmem:[%s156 + $0x8] sm:$0xff]
        %v161 = vld [vmem:[%s156 + $0x10] sm:$0xff]
        %v162 = vld [vmem:[%s156 + $0x18] sm:$0xff]
        %164 = vset.pattern.permute.xlu0 0
        %165 = vperm.xlu0 %164, %v159
        %v166 = vpop.permute.xlu0 %165
        %169 = vset.pattern.permute.xlu0 0
        %170 = vperm.xlu0 %169, %v160
        %v171 = vpop.permute.xlu0 %170
        %174 = vset.pattern.permute.xlu0 0
        %175 = vperm.xlu0 %174, %v161
        %v176 = vpop.permute.xlu0 %175
        %179 = vset.pattern.permute.xlu0 0
        %180 = vperm.xlu0 %179, %v162
        %v181 = vpop.permute.xlu0 %180
        %vm183 = vcmask 130048
        %184 = vst.msk [vmem:[%s151] sm:$0xff] %vm183, %v166
        %185 = vst.msk [vmem:[%s151 + $0x8] sm:$0xff] %vm183, %v171
        %186 = vst.msk [vmem:[%s151 + $0x10] sm:$0xff] %vm183, %v176
        %187 = vst.msk [vmem:[%s151 + $0x18] sm:$0xff] %vm183, %v181
        %v188 = vld [vmem:[%s1] sm:$0x1]
        %v189 = vld [vmem:[%s1 + $0x1] sm:$0x1]
        %v192 = vperm.slane %v188, 0
        %v193 = vperm.slane %v189, 0
        %s196 = scalar_lea.vmem %s151, 32 [#allocation2]
        %197 = vst.msk [vmem:[%s196] sm:$0xff] %vm183, %v192
        %198 = vst.msk [vmem:[%s196 + $0x8] sm:$0xff] %vm183, %v192
        %199 = vst.msk [vmem:[%s196 + $0x10] sm:$0xff] %vm183, %v193
        %200 = vst.msk [vmem:[%s196 + $0x18] sm:$0xff] %vm183, %v193
        %s201 = sand.u32 %s85, 1
        %s202 = scalar_lea.sflag [#allocation3], %s201
        %s203 = sand.u32 %s85, 1
        %s204 = smul.addr %s203, 64
        %s205 = scalar_lea.vmem [#allocation2], %s204
        // Predicated region
        $region29: #{tpu_custom_call.1} parent=27 // pred_check
          %p206 = pneg %p95
        $region30: #{tpu_custom_call.1} parent=27 // pred_check_branch
          %208 = sbr.rel (%p206) target = $region32
        $region31: #{tpu_custom_call.1} parent=27 // pred_region
          %s209 = smul.u32 2, %s21
          %211 = vsyncadd %s202, 0
          %s212 = smul.addr %s20, 8
          %s213 = sadd.s32 %s209, %s212
          %s214 = smul.addr %s213, 8
          %s215 = scalar_lea.hbm %s2, %s214
          %s216 = sshll.u32 %s205, 4
          %s217 = int_to_ptr.vmem [resolvable:$true] %s216
          %s218 = sshll.u32 %s215, 4
          %s219 = int_to_ptr.hbm [resolvable:$true] %s218
          %224 = dma.vmem_to_hbm [thread:$0]  %s217, 1024, %s219, %s202, 128, 128, 8
        $region32: #{tpu_custom_call.1} parent=27 // pred_fallthru
          _
      $region28: #{tpu_custom_call.1} parent=5 // pred_fallthru
        _
      %p225 = scmp.le.s32.totalorder 2, %s11
      // Predicated region
      $region33: #{tpu_custom_call.1} parent=5 // pred_check
        %p226 = pneg %p225
      $region34: #{tpu_custom_call.1} parent=5 // pred_check_branch
        %228 = sbr.rel (%p226) target = $region36
      $region35: #{tpu_custom_call.1} parent=5 // pred_region
        %s229 = ssub.s32 %s11, 2
        // Predicated region
        $region37: #{tpu_custom_call.1} parent=35 // pred_check
          %p230 = pneg %p101
        $region38: #{tpu_custom_call.1} parent=35 // pred_check_branch
          %232 = sbr.rel (%p230) target = $region40
        $region39: #{tpu_custom_call.1} parent=35 // pred_region
          %s233 = sand.u32 %s86, 1
          %s234 = scalar_lea.sflag [#allocation3], %s233
          %s235 = sand.u32 %s86, 1
          %s236 = smul.addr %s235, 64
          %s237 = scalar_lea.vmem [#allocation2], %s236
          %239 = dma.done %s234, 1024
        $region40: #{tpu_custom_call.1} parent=35 // pred_fallthru
          _
      $region36: #{tpu_custom_call.1} parent=5 // pred_fallthru
        _
    $region6: #{tpu_custom_call.1} parent=1 // loop_footer
      %s15 = sadd.s32 1, %s11
    $region7: #{tpu_custom_call.1} parent=1 // loop_footer_branch
      %10 = sbr.rel target = $region3
    $region8: #{tpu_custom_call.1} parent=1 // loop_exit
      _
    %240 = vsyncpa [#allocation3], 1
    %s241 = scalar_lea.sflag [#allocation3], 1
    %242 = vsyncpa %s241, 1

</llo_original>
